<compile_context>
chip_gen: v7x
topology: tpu7x:2x2x1
jax: 0.10.0
libtpu: 0.0.40
codegen_flags: <defaults>
</compile_context>

<pallas_src>
import jax
import jax.numpy as jnp
import numpy as np
from jax.experimental import pallas as pl
from jax.experimental.pallas import tpu as pltpu

_MIN_GRID_STEPS = 4     # >= 4 grid steps -> real pipelining, >= 2 steps per v7x TC
_LANE = 128
_SUBLANE = 8


def _round_up(x, m):
    return (x + m - 1) // m * m


def _vmem_capacity_bytes():
    """Per-TensorCore VMEM capacity; conservative (v7x) fallback if the query fails."""
    try:
        return int(pltpu.get_tpu_info().vmem_capacity_bytes)
    except Exception:
        return 64 * 1024 * 1024


def _choose_tile_b(batch, seq, n_neg, in_itemsize, budget_bytes):
    """Largest batch tile whose *padded* VMEM footprint fits `budget_bytes`,
    capped so the grid keeps >= _MIN_GRID_STEPS steps when the batch allows it.
    """
    # sub-32-bit dtypes pack along sublanes -> sublane tile is 16 (bf16) / 32 (int8)
    sublane_in = _SUBLANE * max(1, 4 // max(in_itemsize, 1))

    # Padded in-VMEM bytes per batch row, per buffer copy, of the input blocks.
    pos_row = _round_up(seq, _LANE) * in_itemsize                              # (tb, S)
    neg_row = _round_up(seq, sublane_in) * _round_up(n_neg, _LANE) * in_itemsize  # (tb, S, N)
    inputs_per_row = 2 * (2 * pos_row + 2 * neg_row)      # pos+logpos, neg+logneg, x2 double-buffer

    # In-kernel f32 temporaries: ~2 live (tb,S,N)-sized values (budget 3) plus a
    # handful of (tb,S)-sized ones, and the (tb,1) output block (double-buffered).
    tmp_per_row = (3 * _round_up(seq, _SUBLANE) * _round_up(n_neg, _LANE) * 4
                   + 8 * _round_up(seq, _LANE) * 4)
    out_per_row = 2 * _LANE * 4
    per_row = inputs_per_row + tmp_per_row + out_per_row

    if batch <= _SUBLANE:
        return int(batch)

    tile = max(_SUBLANE, budget_bytes // max(per_row, 1))
    # Keep the grid at least _MIN_GRID_STEPS deep (best effort for small B).
    cdiv_b = -(-batch // _MIN_GRID_STEPS)
    depth_cap = max(_SUBLANE, (cdiv_b // _SUBLANE) * _SUBLANE)
    tile = min(tile, depth_cap, batch)
    tile = max(_SUBLANE, (tile // _SUBLANE) * _SUBLANE)
    return int(tile)
    # NOTE: if a single 8-row tile ever exceeded the budget (enormous S*N per
    # row) the S/N axes would also need tiling; not needed for realistic sizes.


def _sampled_softmax_kernel(pos_ref, logpos_ref, neg_ref, logneg_ref, out_ref):
    # pos/logpos: (TB, S)   neg/logneg: (TB, S, N)   out: (TB, 1)
    new_pos = (pos_ref[...].astype(jnp.float32)
               - logpos_ref[...].astype(jnp.float32))                    # (TB, S)
    new_neg = (neg_ref[...].astype(jnp.float32)
               - logneg_ref[...].astype(jnp.float32))                    # (TB, S, N)

    # Stable logsumexp over the implicit concat([new_pos, new_neg], last axis).
    # The N reduction is along the lane axis -> XLU (idle unit in this kernel).
    m = jnp.maximum(new_pos, jnp.max(new_neg, axis=-1))                  # (TB, S)
    m_is_ninf = jnp.isneginf(m)
    m_safe = jnp.where(m_is_ninf, 0.0, m)
    sum_exp = (jnp.exp(new_pos - m_safe)
               + jnp.sum(jnp.exp(new_neg - m_safe[..., None]), axis=-1))  # (TB, S)
    lse = jnp.where(m_is_ninf, -jnp.inf, m_safe + jnp.log(sum_exp))

    output = lse - new_pos                                               # (TB, S)
    # torch.nan_to_num(output, posinf=0, nan=0); neginf can never occur here.
    output = jnp.nan_to_num(output, nan=0.0, posinf=0.0)

    notpad = jnp.sum(jnp.logical_not(jnp.isinf(new_pos)).astype(jnp.float32),
                     axis=-1, keepdims=True)                             # (TB, 1)
    row_sum = jnp.sum(output, axis=-1, keepdims=True)                    # (TB, 1)

    # Per-row mean only; the batch mean is done in the wrapper so batch tiles
    # stay fully independent ("parallel" grid axis, ragged last tile safe).
    out_ref[...] = row_sum / notpad


def sampled_softmax(pos_score, log_pos_prob, neg_score, log_neg_prob,
                    temperature=1.0, *, tile_b=None):
    """pos_score/log_pos_prob: (B, S); neg_score/log_neg_prob: (B, S, N)."""
    del temperature  # never used by the reference forward pass (parity kept)
    B, S = pos_score.shape
    N = neg_score.shape[-1]

    in_itemsize = max(jnp.dtype(pos_score.dtype).itemsize,
                      jnp.dtype(neg_score.dtype).itemsize)

    vmem_cap = _vmem_capacity_bytes()
    # <= 48 MiB on v7x (64 MiB physical), <= 96 MiB on v5e/v6e (128 MiB physical).
    vmem_limit = min((vmem_cap * 3) // 4, 96 * 1024 * 1024)
    if tile_b is None:
        tile_b = _choose_tile_b(B, S, N, in_itemsize, budget_bytes=vmem_limit // 2)
    tile_b = int(min(tile_b, B))
    grid = (pl.cdiv(B, tile_b),)

    row_means = pl.pallas_call(
        _sampled_softmax_kernel,
        out_shape=jax.ShapeDtypeStruct((B, 1), jnp.float32),
        grid_spec=pltpu.PrefetchScalarGridSpec(
            num_scalar_prefetch=0,
            grid=grid,
            in_specs=[
                pl.BlockSpec((tile_b, S), lambda b: (b, 0)),
                pl.BlockSpec((tile_b, S), lambda b: (b, 0)),
                pl.BlockSpec((tile_b, S, N), lambda b: (b, 0, 0)),
                pl.BlockSpec((tile_b, S, N), lambda b: (b, 0, 0)),
            ],
            out_specs=pl.BlockSpec((tile_b, 1), lambda b: (b, 0)),
        ),
        compiler_params=pltpu.CompilerParams(
            dimension_semantics=("parallel",),     # independent B tiles (megacore)
            vmem_limit_bytes=int(vmem_limit),
        ),
    )(pos_score, log_pos_prob, neg_score, log_neg_prob)

    # Final batch mean in the wrapper (tiny array; keeps kernel tiles parallel
    # and makes ragged last tiles trivially correct).
    return jnp.mean(row_means)


def _reference(pos_score, log_pos_prob, neg_score, log_neg_prob):
    # Pure-JAX mirror of the PyTorch code path (2D pos, 3D neg).
    new_pos = (pos_score - log_pos_prob).astype(jnp.float32)
    new_neg = (neg_score - log_neg_prob).astype(jnp.float32)
    cat = jnp.concatenate([new_pos[..., None], new_neg], axis=-1)
    lse = jax.scipy.special.logsumexp(cat, axis=-1)
    output = lse - new_pos
    output = jnp.nan_to_num(output, nan=0.0, posinf=0.0)
    notpadnum = jnp.sum(~jnp.isinf(new_pos), axis=-1).astype(jnp.float32)
    return jnp.mean(jnp.sum(output, axis=-1) / notpadnum)


if __name__ == "__main__":
    # --- Test 1: small shapes, -inf padding, single tile (B <= 8 -> grid=(1,)) ---
    B, S, N = 2, 8, 16
    k1, k2, k3, k4 = jax.random.split(jax.random.PRNGKey(0), 4)
    pos_score = jax.random.normal(k1, (B, S), dtype=jnp.float32)
    log_pos_prob = -jnp.abs(jax.random.normal(k2, (B, S), dtype=jnp.float32)) - 0.1
    neg_score = jax.random.normal(k3, (B, S, N), dtype=jnp.float32)
    log_neg_prob = -jnp.abs(jax.random.normal(k4, (B, S, N), dtype=jnp.float32)) - 0.1
    pos_score = pos_score.at[:, -2:].set(-jnp.inf)   # padded positions

    out = jax.block_until_ready(
        sampled_softmax(pos_score, log_pos_prob, neg_score, log_neg_prob))
    ref = _reference(pos_score, log_pos_prob, neg_score, log_neg_prob)
    assert np.allclose(np.asarray(out), np.asarray(ref), rtol=1e-5, atol=1e-5), (out, ref)

    # --- Test 2: multi-tile + ragged last tile (B=20, auto tile_b=8 -> grid=(3,)) ---
    B2 = 20
    k5, k6, k7, k8 = jax.random.split(jax.random.PRNGKey(1), 4)
    pos2 = jax.random.normal(k5, (B2, S), dtype=jnp.float32)
    logpos2 = -jnp.abs(jax.random.normal(k6, (B2, S), dtype=jnp.float32)) - 0.1
    neg2 = jax.random.normal(k7, (B2, S, N), dtype=jnp.float32)
    logneg2 = -jnp.abs(jax.random.normal(k8, (B2, S, N), dtype=jnp.float32)) - 0.1
    pos2 = pos2.at[::3, -1].set(-jnp.inf)            # some padded positions
    out2 = jax.block_until_ready(sampled_softmax(pos2, logpos2, neg2, logneg2))
    ref2 = _reference(pos2, logpos2, neg2, logneg2)
    assert np.allclose(np.asarray(out2), np.asarray(ref2), rtol=1e-5, atol=1e-5), (out2, ref2)

    # --- Test 3: bf16 inputs (halved HBM traffic); math stays f32 in-kernel ---
    pos_bf, logpos_bf = pos2.astype(jnp.bfloat16), logpos2.astype(jnp.bfloat16)
    neg_bf, logneg_bf = neg2.astype(jnp.bfloat16), logneg2.astype(jnp.bfloat16)
    out_bf = jax.block_until_ready(
        sampled_softmax(pos_bf, logpos_bf, neg_bf, logneg_bf))
    ref_bf = _reference(pos_bf, logpos_bf, neg_bf, logneg_bf)
    assert np.isfinite(np.asarray(out_bf))
    assert np.allclose(np.asarray(out_bf), np.asarray(ref_bf), rtol=5e-2, atol=5e-2), (out_bf, ref_bf)

    print("KERNEL_OK")
</pallas_src>

<mosaic_0001>
module attributes {stable_mosaic.version = 11 : i64} {
  func.func @_sampled_softmax_kernel(%arg0: i32, %arg1: memref<2x8xf32, #tpu.memory_space<vmem>>, %arg2: memref<2x8xf32, #tpu.memory_space<vmem>>, %arg3: memref<2x8x16xf32, #tpu.memory_space<vmem>>, %arg4: memref<2x8x16xf32, #tpu.memory_space<vmem>>, %arg5: memref<2x1xf32, #tpu.memory_space<vmem>>) attributes {dimension_semantics = [#tpu.dimension_semantics<parallel>], iteration_bounds = array<i64: 1>, scalar_prefetch = 0 : i64, scratch_operands = 0 : i64, tpu.core_type = #tpu.core_type<tc>, window_params = [{transform_indices = @transform_0, window_bounds = array<i64: 2, 8>}, {transform_indices = @transform_1, window_bounds = array<i64: 2, 8>}, {transform_indices = @transform_2, window_bounds = array<i64: 2, 8, 16>}, {transform_indices = @transform_3, window_bounds = array<i64: 2, 8, 16>}, {transform_indices = @transform_4, window_bounds = array<i64: 2, 1>}]} {
    %c0 = arith.constant 0 : index
    %c0_0 = arith.constant 0 : index
    %0 = vector.load %arg1[%c0, %c0_0] : memref<2x8xf32, #tpu.memory_space<vmem>>, vector<2x8xf32>
    %c0_1 = arith.constant 0 : index
    %c0_2 = arith.constant 0 : index
    %1 = vector.load %arg2[%c0_1, %c0_2] : memref<2x8xf32, #tpu.memory_space<vmem>>, vector<2x8xf32>
    %2 = arith.subf %0, %1 : vector<2x8xf32>
    %c0_3 = arith.constant 0 : index
    %c0_4 = arith.constant 0 : index
    %c0_5 = arith.constant 0 : index
    %3 = vector.load %arg3[%c0_3, %c0_4, %c0_5] : memref<2x8x16xf32, #tpu.memory_space<vmem>>, vector<2x8x16xf32>
    %c0_6 = arith.constant 0 : index
    %c0_7 = arith.constant 0 : index
    %c0_8 = arith.constant 0 : index
    %4 = vector.load %arg4[%c0_6, %c0_7, %c0_8] : memref<2x8x16xf32, #tpu.memory_space<vmem>>, vector<2x8x16xf32>
    %5 = arith.subf %3, %4 : vector<2x8x16xf32>
    %cst = arith.constant dense<0xFF800000> : vector<2x8xf32>
    %6 = vector.multi_reduction <maximumf>, %5, %cst [2] : vector<2x8x16xf32> to vector<2x8xf32>
    %7 = arith.maximumf %2, %6 : vector<2x8xf32>
    %cst_9 = arith.constant 0xFF800000 : f32
    %8 = vector.broadcast %cst_9 : f32 to vector<2x8xf32>
    %9 = arith.cmpf oeq, %7, %8 : vector<2x8xf32>
    %cst_10 = arith.constant 0.000000e+00 : f32
    %10 = vector.broadcast %cst_10 : f32 to vector<2x8xf32>
    %11 = arith.select %9, %10, %7 : vector<2x8xi1>, vector<2x8xf32>
    %12 = arith.subf %2, %11 : vector<2x8xf32>
    %13 = math.exp %12 : vector<2x8xf32>
    %14 = vector.shape_cast %11 : vector<2x8xf32> to vector<2x8x1xf32>
    %15 = vector.broadcast %14 : vector<2x8x1xf32> to vector<2x8x16xf32>
    %16 = arith.subf %5, %15 : vector<2x8x16xf32>
    %17 = math.exp %16 : vector<2x8x16xf32>
    %cst_11 = arith.constant dense<0.000000e+00> : vector<2x8xf32>
    %18 = vector.multi_reduction <add>, %17, %cst_11 [2] : vector<2x8x16xf32> to vector<2x8xf32>
    %19 = arith.addf %13, %18 : vector<2x8xf32>
    %20 = math.log %19 : vector<2x8xf32>
    %21 = arith.addf %11, %20 : vector<2x8xf32>
    %cst_12 = arith.constant 0xFF800000 : f32
    %22 = vector.broadcast %cst_12 : f32 to vector<2x8xf32>
    %23 = arith.select %9, %22, %21 : vector<2x8xi1>, vector<2x8xf32>
    %24 = arith.subf %23, %2 : vector<2x8xf32>
    %cst_13 = arith.constant 0.000000e+00 : f32
    %cst_14 = arith.constant 0.000000e+00 : f32
    %25 = arith.cmpf one, %24, %24 : vector<2x8xf32>
    %26 = vector.broadcast %cst_13 : f32 to vector<2x8xf32>
    %27 = arith.select %25, %26, %24 : vector<2x8xi1>, vector<2x8xf32>
    %cst_15 = arith.constant 0x7F800000 : f32
    %28 = vector.broadcast %cst_15 : f32 to vector<2x8xf32>
    %29 = arith.cmpf oeq, %27, %28 : vector<2x8xf32>
    %30 = vector.broadcast %cst_14 : f32 to vector<2x8xf32>
    %31 = arith.select %29, %30, %27 : vector<2x8xi1>, vector<2x8xf32>
    %cst_16 = arith.constant 0xFF800000 : f32
    %32 = vector.broadcast %cst_16 : f32 to vector<2x8xf32>
    %33 = arith.cmpf oeq, %31, %32 : vector<2x8xf32>
    %cst_17 = arith.constant -3.40282347E+38 : f32
    %34 = vector.broadcast %cst_17 : f32 to vector<2x8xf32>
    %35 = arith.select %33, %34, %31 : vector<2x8xi1>, vector<2x8xf32>
    %36 = math.absf %2 : vector<2x8xf32>
    %cst_18 = arith.constant 0x7F800000 : f32
    %37 = vector.broadcast %cst_18 : f32 to vector<2x8xf32>
    %38 = arith.cmpf oeq, %36, %37 : vector<2x8xf32>
    %cst_19 = arith.constant dense<true> : vector<2x8xi1>
    %39 = arith.xori %38, %cst_19 : vector<2x8xi1>
    %40 = arith.extui %39 : vector<2x8xi1> to vector<2x8xi32>
    %41 = arith.sitofp %40 : vector<2x8xi32> to vector<2x8xf32>
    %cst_20 = arith.constant dense<0.000000e+00> : vector<2xf32>
    %42 = vector.multi_reduction <add>, %41, %cst_20 [1] : vector<2x8xf32> to vector<2xf32>
    %43 = vector.shape_cast %42 : vector<2xf32> to vector<2x1xf32>
    %cst_21 = arith.constant dense<0.000000e+00> : vector<2xf32>
    %44 = vector.multi_reduction <add>, %35, %cst_21 [1] : vector<2x8xf32> to vector<2xf32>
    %45 = vector.shape_cast %44 : vector<2xf32> to vector<2x1xf32>
    %46 = arith.divf %45, %43 : vector<2x1xf32>
    %c0_22 = arith.constant 0 : index
    %c0_23 = arith.constant 0 : index
    %47 = vector.load %arg5[%c0_22, %c0_23] : memref<2x1xf32, #tpu.memory_space<vmem>>, vector<2x1xf32>
    tpu.vector_store %arg5[%c0_22, %c0_23], %46 {strides = array<i32>} : memref<2x1xf32, #tpu.memory_space<vmem>>, vector<2x1xf32>,
    return
  }
  func.func @transform_0(%arg0: i32) -> (i32, i32) {
    %c0_i32 = arith.constant 0 : i32
    %c0_i32_0 = arith.constant 0 : i32
    return %arg0, %c0_i32 : i32, i32
  }
  func.func @transform_1(%arg0: i32) -> (i32, i32) {
    %c0_i32 = arith.constant 0 : i32
    %c0_i32_0 = arith.constant 0 : i32
    return %arg0, %c0_i32 : i32, i32
  }
  func.func @transform_2(%arg0: i32) -> (i32, i32, i32) {
    %c0_i32 = arith.constant 0 : i32
    %c0_i32_0 = arith.constant 0 : i32
    %c0_i32_1 = arith.constant 0 : i32
    return %arg0, %c0_i32, %c0_i32_0 : i32, i32, i32
  }
  func.func @transform_3(%arg0: i32) -> (i32, i32, i32) {
    %c0_i32 = arith.constant 0 : i32
    %c0_i32_0 = arith.constant 0 : i32
    %c0_i32_1 = arith.constant 0 : i32
    return %arg0, %c0_i32, %c0_i32_0 : i32, i32, i32
  }
  func.func @transform_4(%arg0: i32) -> (i32, i32) {
    %c0_i32 = arith.constant 0 : i32
    %c0_i32_0 = arith.constant 0 : i32
    return %arg0, %c0_i32 : i32, i32
  }
}

</mosaic_0001>

<llo_original>
// kernel: tpu_custom_call.1
$region0: #{tpu_custom_call.1}
  #allocation0 [shape = 'u32[]', space=smem, size = 0x4, offset = 0x4, fixed_abs, tag = 'smem constant byte address 0x4 - core index']
  #allocation1 [shape = 'u32[144,128]{1,0:T(1,128)}', space=vmem, size = 0x12000, scoped, tag = 'internal scratch']
  %s0 = inlined_call_operand.hbm [shape: f32[2,8], index: 0, kind: input, shape index: {}]
  %s1 = inlined_call_operand.vmem [shape: f32[2,8], index: 1, kind: input, shape index: {}]
  %s2 = inlined_call_operand.hbm [shape: f32[2,8,16], index: 2, kind: input, shape index: {}]
  %s3 = inlined_call_operand.hbm [shape: f32[2,8,16], index: 3, kind: input, shape index: {}]
  %s4 = inlined_call_operand.vmem [shape: f32[2,1], index: 4, kind: output, shape index: {}]
  %s5 = sld [smem:[#allocation0]]
  $region38: #{tpu_custom_call.1} parent=0
    _
  %s7 = ssub.s32 1, %s5
  %s8 = scalar_select 0, %s7, %s5
  $region1: #{tpu_custom_call.1} parent=0
    #allocation2 [shape = 'u8[1024]{0}', space=vmem, size = 0x400, scoped, tag = 'input window, operand 0, single buffered']
    #allocation3 [shape = 's32[1]{0}', space=sflag, size = 0x4, scoped, tag = 'scoped memory for tpu_custom_call.1']
    #allocation4 [shape = 'u8[8192]{0}', space=vmem, size = 0x2000, scoped, tag = 'input window, operand 2, single buffered']
    #allocation5 [shape = 's32[1]{0}', space=sflag, size = 0x4, scoped, tag = 'scoped memory for tpu_custom_call.1']
    #allocation6 [shape = 'u8[8192]{0}', space=vmem, size = 0x2000, scoped, tag = 'input window, operand 3, single buffered']
    %9 = vsyncpa [#allocation3], 0
    %10 = vsyncpa [#allocation5], 0
    // Predicated region
    $region2: #{tpu_custom_call.1} parent=1 // pred_check
      _
    $region3: #{tpu_custom_call.1} parent=1 // pred_check_branch
      %12 = sbr.rel (0) target = $region5
    $region4: #{tpu_custom_call.1} parent=1 // pred_region
      %s14 = ssub.s32 32, 32
      %15 = vsyncadd [#allocation3], %s14
      %s17 = sshll.u32 [#allocation2], 4
      %s18 = int_to_ptr.vmem [resolvable:$true] %s17
      %20 = dma.hbm_to_vmem [thread:$0]  %s0, 32, %s18, [#allocation3]
    $region5: #{tpu_custom_call.1} parent=1 // pred_fallthru
      _
    // Predicated region
    $region6: #{tpu_custom_call.1} parent=1 // pred_check
      _
    $region7: #{tpu_custom_call.1} parent=1 // pred_check_branch
      %22 = sbr.rel (0) target = $region9
    $region8: #{tpu_custom_call.1} parent=1 // pred_region
      _
    $region9: #{tpu_custom_call.1} parent=1 // pred_fallthru
      _
    // Predicated region
    $region10: #{tpu_custom_call.1} parent=1 // pred_check
      _
    $region11: #{tpu_custom_call.1} parent=1 // pred_check_branch
      %24 = sbr.rel (0) target = $region13
    $region12: #{tpu_custom_call.1} parent=1 // pred_region
      %s26 = ssub.s32 256, 256
      %27 = vsyncadd [#allocation5], %s26
      %s28 = sshll.u32 [#allocation4], 4
      %s29 = int_to_ptr.vmem [resolvable:$true] %s28
      %34 = dma.hbm_to_vmem [thread:$0]  %s2, 256, %s29, [#allocation5], 128, 128, 8
    $region13: #{tpu_custom_call.1} parent=1 // pred_fallthru
      _
    // Predicated region
    $region14: #{tpu_custom_call.1} parent=1 // pred_check
      _
    $region15: #{tpu_custom_call.1} parent=1 // pred_check_branch
      %36 = sbr.rel (0) target = $region17
    $region16: #{tpu_custom_call.1} parent=1 // pred_region
      %s38 = ssub.s32 256, 256
      %39 = vsyncadd [#allocation5], %s38
      %s40 = sshll.u32 [#allocation6], 4
      %s41 = int_to_ptr.vmem [resolvable:$true] %s40
      %46 = dma.hbm_to_vmem [thread:$0]  %s3, 256, %s41, [#allocation5], 128, 128, 8
    $region17: #{tpu_custom_call.1} parent=1 // pred_fallthru
      _
    // Predicated region
    $region18: #{tpu_custom_call.1} parent=1 // pred_check
      _
    $region19: #{tpu_custom_call.1} parent=1 // pred_check_branch
      %48 = sbr.rel (0) target = $region21
    $region20: #{tpu_custom_call.1} parent=1 // pred_region
      %49 = dma.done [#allocation3], 32
    $region21: #{tpu_custom_call.1} parent=1 // pred_fallthru
      _
    // Predicated region
    $region22: #{tpu_custom_call.1} parent=1 // pred_check
      _
    $region23: #{tpu_custom_call.1} parent=1 // pred_check_branch
      %51 = sbr.rel (0) target = $region25
    $region24: #{tpu_custom_call.1} parent=1 // pred_region
      %52 = dma.done [#allocation5], 256
    $region25: #{tpu_custom_call.1} parent=1 // pred_fallthru
      _
    // Predicated region
    $region26: #{tpu_custom_call.1} parent=1 // pred_check
      _
    $region27: #{tpu_custom_call.1} parent=1 // pred_check_branch
      %54 = sbr.rel (0) target = $region29
    $region28: #{tpu_custom_call.1} parent=1 // pred_region
      %55 = dma.done [#allocation5], 256
    $region29: #{tpu_custom_call.1} parent=1 // pred_fallthru
      _
    %v56 = vld [vmem:[#allocation2] sm:$0x3]
    %v57 = vld [vmem:[%s1] sm:$0x3]
    %v58 = vsub.f32 %v56, %v57
    %v59 = vld [vmem:[#allocation4] sm:$0xff]
    %v60 = vld [vmem:[#allocation4 + $0x8] sm:$0xff]
    %v61 = vld [vmem:[#allocation6] sm:$0xff]
    %v62 = vld [vmem:[#allocation6 + $0x8] sm:$0xff]
    %v63 = vsub.f32 %v59, %v61
    %v64 = vsub.f32 %v60, %v62
    %vm65 = vcmask 130048
    %v66 = vsel %vm65, %v63, -inf
    %67 = vmax.xlane.f32.xlu0 %v66
    %v68 = vpop.xlane.xlu0 %67
    %v69 = vsel %vm65, %v64, -inf
    %70 = vmax.xlane.f32.xlu0 %v69
    %v71 = vpop.xlane.xlu0 %70
    %v74 = vlaneseq
    %v75 = vand.u32 %v74, 127
    %v76 = vlaneseq
    %v77 = vshrl.u32 %v76, 7
    %v78 = vsub.s32 %v75, %v77
    %v79 = vrot.slane %v68, %v78
    %v80 = vlaneseq
    %v81 = vshrl.u32 %v80, 7
    %v82 = vsub.s32 %v75, %v81
    %v83 = vrot.slane %v71, %v82
    %vm84 = vcmask 1041409
    %v85 = vsel %vm84, %v83, %v79
    %v87 = vmax.f32 %v58, %v85
    %vm88 = vcmp.eq.f32.partialorder %v87, -inf
    %v89 = vsel %vm88, 0.0, %v87
    %v90 = vsub.f32 %v58, %v89
    %v91 = vmul.f32 %v90, 1.442695
    %v92 = vpow.pop %v91
    %v93 = vlaneseq
    %v94 = vshrl.u32 %v93, 7
    %v95 = vsub.s32 0, %v94
    %v96 = vrot.slane %v89, %v95
    %98 = vbcast.lane.b32.xlu0 %v96, 256
    %v99 = vpop.permute.xlu0 %98
    %v100 = vlaneseq
    %v101 = vshrl.u32 %v100, 7
    %v102 = vsub.s32 1, %v101
    %v103 = vrot.slane %v89, %v102
    %105 = vbcast.lane.b32.xlu0 %v103, 256
    %v106 = vpop.permute.xlu0 %105
    %v107 = vsub.f32 %v63, %v99
    %v108 = vsub.f32 %v64, %v106
    %v109 = vmul.f32 %v107, 1.442695
    %v110 = vpow.pop %v109
    %v111 = vmul.f32 %v108, 1.442695
    %v112 = vpow.pop %v111
    %v113 = vsel %vm65, %v110, 0.0
    %114 = vadd.xlane.f32.xlu0 %v113
    %v115 = vpop.xlane.xlu0 %114
    %v116 = vsel %vm65, %v112, 0.0
    %117 = vadd.xlane.f32.xlu0 %v116
    %v118 = vpop.xlane.xlu0 %117
    %v121 = vlaneseq
    %v122 = vshrl.u32 %v121, 7
    %v123 = vsub.s32 %v75, %v122
    %v124 = vrot.slane %v115, %v123
    %v125 = vlaneseq
    %v126 = vshrl.u32 %v125, 7
    %v127 = vsub.s32 %v75, %v126
    %v128 = vrot.slane %v118, %v127
    %v129 = vsel %vm84, %v128, %v124
    %v131 = vadd.f32 %v92, %v129
    %v132 = vlog2.pop %v131
    %v133 = vmul.f32 %v132, 0.6931472
    %v134 = vadd.f32 %v89, %v133
    %v135 = vsel %vm88, -inf, %v134
    %v136 = vsub.f32 %v135, %v58
    %vm137 = vcmp.ne.f32.partialorder %v136, %v136
    %v138 = vsel %vm137, 0.0, %v136
    %vm139 = vcmp.eq.f32.partialorder %v138, inf
    %v140 = vsel %vm139, 0.0, %v138
    %vm141 = vcmp.eq.f32.partialorder %v140, -inf
    %v142 = vsel %vm141, -3.4028235e+38, %v140
    %v143 = vand.u32 2147483647, %v58
    %vm144 = vcmp.eq.f32.partialorder %v143, inf
    %vm145 = vmxor %vm144, 1
    %v146 = vsel %vm145, 1, 0
    %v147 = vcvt.s32.f32 %v146
    %vm148 = vcmask 58368
    %v149 = vsel %vm148, %v147, 0.0
    %150 = vadd.xlane.f32.xlu0 %v149
    %v151 = vpop.xlane.xlu0 %150
    %v152 = vsel %vm148, %v142, 0.0
    %153 = vadd.xlane.f32.xlu0 %v152
    %v154 = vpop.xlane.xlu0 %153
    %v155 = vrcp.pop %v151
    %v156 = vmul.f32 %v154, %v155
    %vm157 = vcmask 1024
    %158 = vst.msk [vmem:[%s4] sm:$0x3] %vm157, %v156
    // Predicated region
    $region30: #{tpu_custom_call.1} parent=1 // pred_check
      _
    $region31: #{tpu_custom_call.1} parent=1 // pred_check_branch
      %160 = sbr.rel (0) target = $region33
    $region32: #{tpu_custom_call.1} parent=1 // pred_region
      _
    $region33: #{tpu_custom_call.1} parent=1 // pred_fallthru
      _
    // Predicated region
    $region34: #{tpu_custom_call.1} parent=1 // pred_check
      _
    $region35: #{tpu_custom_call.1} parent=1 // pred_check_branch
      %162 = sbr.rel (0) target = $region37
    $region36: #{tpu_custom_call.1} parent=1 // pred_region
      _
    $region37: #{tpu_custom_call.1} parent=1 // pred_fallthru
      _
    %163 = vsyncpa [#allocation3], 1
    %164 = vsyncpa [#allocation5], 1

</llo_original>
